<compile_context>
chip_gen: v7x
topology: tpu7x:2x2x1
jax: 0.10.0
libtpu: 0.0.40
codegen_flags: <defaults>
</compile_context>

<pallas_src>
import jax
import jax.numpy as jnp
from jax.experimental import pallas as pl
from jax.experimental.pallas import tpu as pltpu

LANES = 128
SUBLANES = 8
NUM_CORES = 2                                   # leading "parallel" grid axis
MAX_BLOCK_BYTES_PER_INPUT = 2 * 1024 * 1024     # ~2 MiB DMA block per input
SUB_ROWS_BASE = 512                             # rows per unrolled compute chunk (f32)
VMEM_LIMIT_BYTES = 32 * 1024 * 1024


def _abs_and_mask_sums(p, t):
    """sum(nan_to_0(|p - t| * mask0)) and sum(mask0) for null_val = 0.0."""
    pf = p.astype(jnp.float32)
    tf = t.astype(jnp.float32)
    m = (tf != 0.0).astype(jnp.float32)
    d = jnp.abs(pf - tf) * m
    d = jnp.where(jnp.isnan(d), jnp.float32(0.0), d)   # matches torch nan -> 0
    return jnp.sum(d), jnp.sum(m)


def _make_masked_mae_kernel(block_rows, steps, tail_rows, sub_rows):
    """All sizes are static Python ints (multiples of the packed sublane count)."""

    def _chunk_plan(nrows):
        plan, off = [], 0
        while off < nrows:
            rc = min(sub_rows, nrows - off)
            plan.append((off, rc))
            off += rc
        return plan

    def _accumulate(pred_ref, true_ref, out_ref, nrows):
        a_tot = None
        m_tot = None
        # Static (unrolled) chunk loop: static slices are free, and unrolling
        # lets the scheduler interleave loads / VALU work across chunks.
        for off, rc in _chunk_plan(nrows):
            t = true_ref[0, off:off + rc, :].astype(jnp.float32)
            p = pred_ref[0, off:off + rc, :].astype(jnp.float32)
            m = (t != 0.0).astype(jnp.float32)
            d = jnp.abs(p - t) * m
            d = jnp.where(jnp.isnan(d), jnp.float32(0.0), d)   # nan -> 0 (torch)
            # Reduce each chunk to (8,128) in-register (tile-aligned reshape).
            a_c = d.reshape(rc // SUBLANES, SUBLANES, LANES).sum(axis=0)
            m_c = m.reshape(rc // SUBLANES, SUBLANES, LANES).sum(axis=0)
            a_tot = a_c if a_tot is None else a_tot + a_c
            m_tot = m_c if m_tot is None else m_tot + m_c
        # Only 2 small (8,128) RMWs on the resident output block per grid step.
        out_ref[0, 0] += a_tot
        out_ref[0, 1] += m_tot

    def kernel(pred_ref, true_ref, out_ref):
        # pred_ref / true_ref : (1, block_rows, 128) VMEM tiles, native dtype
        # out_ref             : (1, 2, 8, 128) f32, resident across the inner
        #                       reduction axis; [0]=sum(|d|*mask), [1]=sum(mask)
        step = pl.program_id(1)

        @pl.when(step == 0)
        def _init():
            out_ref[...] = jnp.zeros_like(out_ref)

        if tail_rows == block_rows:
            # Every block is full: single branch-free fast path.
            _accumulate(pred_ref, true_ref, out_ref, block_rows)
        else:
            @pl.when(step < steps - 1)
            def _full():
                _accumulate(pred_ref, true_ref, out_ref, block_rows)

            @pl.when(step == steps - 1)
            def _tail():
                # Last (partial) block: only the first tail_rows rows are valid;
                # tail_rows is static, so no dynamic masking is needed.
                _accumulate(pred_ref, true_ref, out_ref, tail_rows)

    return kernel


def masked_mae_pallas(y_pred, y_true):
    """masked_mae(y_pred, y_true, null_val=0.0) via a Pallas TPU kernel."""
    assert y_pred.shape == y_true.shape
    n = int(y_pred.size)
    if n == 0:
        return jnp.float32(0.0)

    p = jnp.ravel(y_pred)
    t = jnp.ravel(y_true)

    isz_p = jnp.dtype(p.dtype).itemsize
    isz_t = jnp.dtype(t.dtype).itemsize
    packing = max(1, 4 // min(isz_p, isz_t))    # bf16 -> 2, int8/fp8 -> 4
    row_align = SUBLANES * packing
    align_elems = NUM_CORES * row_align * LANES

    if n < align_elems:                         # tiny input: plain JAX
        na, nm = _abs_and_mask_sums(p, t)
        return jnp.where(nm > 0, na / nm, jnp.float32(0.0))

    # Aligned prefix goes through the kernel; the small remainder goes to JAX.
    n_main = (n // align_elems) * align_elems
    rows = n_main // LANES
    rows_per_core = rows // NUM_CORES           # multiple of row_align

    max_block_rows = MAX_BLOCK_BYTES_PER_INPUT // (LANES * max(isz_p, isz_t))
    max_block_rows = max(row_align, (max_block_rows // row_align) * row_align)
    block_rows = rows_per_core if rows_per_core <= max_block_rows else max_block_rows
    steps = -(-rows_per_core // block_rows)
    tail_rows = rows_per_core - (steps - 1) * block_rows   # static, multiple of row_align
    sub_rows = min(block_rows, SUB_ROWS_BASE * packing)

    # TODO(synk): for shapes whose trailing dims are not lane-aligned (e.g.
    # (..., 325, 9)), XLA may still emit one relayout copy for the flat view;
    # at least no extra explicit pad pass is added here.
    p_main = p[:n_main].reshape(NUM_CORES, rows_per_core, LANES)
    t_main = t[:n_main].reshape(NUM_CORES, rows_per_core, LANES)

    kernel = _make_masked_mae_kernel(block_rows, steps, tail_rows, sub_rows)

    partials = pl.pallas_call(
        kernel,
        out_shape=jax.ShapeDtypeStruct((NUM_CORES, 2, SUBLANES, LANES), jnp.float32),
        grid_spec=pl.GridSpec(
            grid=(NUM_CORES, steps),
            in_specs=[
                pl.BlockSpec((1, block_rows, LANES), lambda c, s: (c, s, 0)),
                pl.BlockSpec((1, block_rows, LANES), lambda c, s: (c, s, 0)),
            ],
            out_specs=pl.BlockSpec((1, 2, SUBLANES, LANES),
                                   lambda c, s: (c, 0, 0, 0)),
        ),
        compiler_params=pltpu.CompilerParams(
            dimension_semantics=("parallel", "arbitrary"),
            vmem_limit_bytes=VMEM_LIMIT_BYTES),
    )(p_main, t_main)

    num = jnp.sum(partials[:, 0])
    den = jnp.sum(partials[:, 1])
    if n_main < n:
        ta, tm = _abs_and_mask_sums(p[n_main:], t[n_main:])
        num = num + ta
        den = den + tm
    # Empty mask -> 0.0 matches the PyTorch nan -> 0 behavior of masked_mae.
    return jnp.where(den > 0, num / den, jnp.float32(0.0))


class AbstractModelPallas:
    """JAX/Pallas analogue of the PyTorch AbstractModel wrapper."""

    def __init__(self, model=None, config=None, scalar=None):
        self.model = model
        self.config = config
        self.scalar = scalar

    def forward(self, batch):
        # TODO(synk): abstract in the reference (body is `pass`) — no compute to port.
        pass

    def predict(self, batch):
        # TODO(synk): abstract in the reference (body is `pass`) — no compute to port.
        pass

    def calculate_loss(self, batch, is_valid=False):
        # TODO(synk): abstract in the reference (body is `pass`) — no compute to port.
        pass

    def supervised_loss(self, y_predicted, y_true):
        loss = masked_mae_pallas(y_predicted, y_true)
        # TODO(synk): the `if loss.item() > 1000: pdb.set_trace()` debugger hook
        # has no Pallas/JAX equivalent and is a no-op for normal values.
        return loss


def masked_mae_ref(y_pred, y_true):
    """Pure-JAX reference of PyTorch masked_mae(null_val=0.0)."""
    p = y_pred.astype(jnp.float32)
    t = y_true.astype(jnp.float32)
    mask = (t != 0.0).astype(jnp.float32)
    mask = mask / jnp.mean(mask)
    mask = jnp.where(jnp.isnan(mask), jnp.zeros_like(mask), mask)
    loss = jnp.abs(p - t) * mask
    loss = jnp.where(jnp.isnan(loss), jnp.zeros_like(loss), loss)
    return jnp.mean(loss)


if __name__ == "__main__":
    key = jax.random.PRNGKey(0)
    model = AbstractModelPallas(model=None, config={}, scalar=None)

    # Case 1: small traffic-state shape, exactly 2*8*128 elements (kernel path,
    # one full block per core) + a NaN prediction to exercise nan -> 0.
    k1, k2, k3, key = jax.random.split(key, 4)
    shape = (2, 8, 16, 8)
    y_true = jax.random.normal(k1, shape, dtype=jnp.float32)
    zero_mask = jax.random.bernoulli(k3, p=0.2, shape=shape)
    y_true = jnp.where(zero_mask, jnp.zeros_like(y_true), y_true)
    y_pred = y_true + 0.1 * jax.random.normal(k2, shape, dtype=jnp.float32)
    y_pred = y_pred.at[0, 0, 0, 1].set(jnp.nan)

    loss = jax.block_until_ready(model.supervised_loss(y_pred, y_true))
    ref = masked_mae_ref(y_pred, y_true)
    assert jnp.allclose(loss, ref, rtol=1e-5, atol=1e-6), (loss, ref)

    # Case 2: non-aligned shape (tail handled in plain JAX).
    k1, k2, k3, key = jax.random.split(key, 4)
    shape2 = (8, 12, 325, 9)
    y_true2 = jax.random.normal(k1, shape2, dtype=jnp.float32)
    zero_mask2 = jax.random.bernoulli(k3, p=0.25, shape=shape2)
    y_true2 = jnp.where(zero_mask2, jnp.zeros_like(y_true2), y_true2)
    y_pred2 = y_true2 + 0.1 * jax.random.normal(k2, shape2, dtype=jnp.float32)

    loss2 = jax.block_until_ready(model.supervised_loss(y_pred2, y_true2))
    ref2 = masked_mae_ref(y_pred2, y_true2)
    assert jnp.allclose(loss2, ref2, rtol=1e-5, atol=1e-5), (loss2, ref2)

    # Case 3: larger input exercising multiple blocks per core and the
    # partial-last-block path.
    k1, k2, k3, key = jax.random.split(key, 4)
    shape3 = (4, 12, 325, 90)
    y_true3 = jax.random.normal(k1, shape3, dtype=jnp.float32)
    zero_mask3 = jax.random.bernoulli(k3, p=0.3, shape=shape3)
    y_true3 = jnp.where(zero_mask3, jnp.zeros_like(y_true3), y_true3)
    y_pred3 = y_true3 + 0.1 * jax.random.normal(k2, shape3, dtype=jnp.float32)

    loss3 = jax.block_until_ready(model.supervised_loss(y_pred3, y_true3))
    ref3 = masked_mae_ref(y_pred3, y_true3)
    assert jnp.allclose(loss3, ref3, rtol=1e-4, atol=1e-5), (loss3, ref3)

    # Case 4: bf16 inputs (dtype-aware 16-row alignment / block sizing).
    k1, k2, k3, key = jax.random.split(key, 4)
    shape4 = (4, 12, 170, 7)
    y_true4 = jax.random.normal(k1, shape4, dtype=jnp.float32)
    zero_mask4 = jax.random.bernoulli(k3, p=0.3, shape=shape4)
    y_true4 = jnp.where(zero_mask4, jnp.zeros_like(y_true4), y_true4).astype(jnp.bfloat16)
    y_pred4 = (y_true4.astype(jnp.float32)
               + 0.1 * jax.random.normal(k2, shape4, dtype=jnp.float32)).astype(jnp.bfloat16)

    loss4 = jax.block_until_ready(model.supervised_loss(y_pred4, y_true4))
    ref4 = masked_mae_ref(y_pred4, y_true4)
    assert jnp.allclose(loss4, ref4, rtol=1e-3, atol=1e-4), (loss4, ref4)

    # Case 5: all-zero labels -> empty mask -> loss 0 (kernel path).
    z = jnp.zeros(shape, jnp.float32)
    loss_z = jax.block_until_ready(model.supervised_loss(z, z))
    assert float(loss_z) == 0.0, loss_z

    # Case 6: tiny input -> pure-JAX fallback path.
    small_p = jnp.arange(15, dtype=jnp.float32).reshape(3, 5)
    small_t = jnp.ones((3, 5), jnp.float32).at[0, 0].set(0.0)
    loss_s = jax.block_until_ready(model.supervised_loss(small_p, small_t))
    ref_s = masked_mae_ref(small_p, small_t)
    assert jnp.allclose(loss_s, ref_s, rtol=1e-6, atol=1e-6), (loss_s, ref_s)

    print("KERNEL_OK")
</pallas_src>

<mosaic_0001>
module attributes {stable_mosaic.version = 11 : i64} {
  func.func @kernel(%arg0: i32, %arg1: i32, %arg2: memref<1x8x128xf32, #tpu.memory_space<vmem>>, %arg3: memref<1x8x128xf32, #tpu.memory_space<vmem>>, %arg4: memref<1x2x8x128xf32, #tpu.memory_space<vmem>>) attributes {dimension_semantics = [#tpu.dimension_semantics<parallel>, #tpu.dimension_semantics<arbitrary>], iteration_bounds = array<i64: 2, 1>, scalar_prefetch = 0 : i64, scratch_operands = 0 : i64, tpu.core_type = #tpu.core_type<tc>, window_params = [{transform_indices = @transform_0, window_bounds = array<i64: 1, 8, 128>}, {transform_indices = @transform_1, window_bounds = array<i64: 1, 8, 128>}, {transform_indices = @transform_2, window_bounds = array<i64: 1, 2, 8, 128>}]} {
    %c0_i32 = arith.constant 0 : i32
    %0 = arith.cmpi eq, %arg1, %c0_i32 : i32
    %1 = arith.extui %0 : i1 to i32
    %c0_i32_0 = arith.constant 0 : i32
    %2 = arith.cmpi ne, %1, %c0_i32_0 : i32
    scf.if %2 {
      %cst_24 = arith.constant 0.000000e+00 : f32
      %33 = vector.broadcast %cst_24 : f32 to vector<1x2x8x128xf32>
      %c0_25 = arith.constant 0 : index
      %c0_26 = arith.constant 0 : index
      %c0_27 = arith.constant 0 : index
      %c0_28 = arith.constant 0 : index
      %34 = vector.load %arg4[%c0_25, %c0_26, %c0_27, %c0_28] : memref<1x2x8x128xf32, #tpu.memory_space<vmem>>, vector<1x2x8x128xf32>
      tpu.vector_store %arg4[%c0_25, %c0_26, %c0_27, %c0_28], %33 {strides = array<i32>} : memref<1x2x8x128xf32, #tpu.memory_space<vmem>>, vector<1x2x8x128xf32>,
    } else {
    }
    %c0 = arith.constant 0 : index
    %c0_1 = arith.constant 0 : index
    %c0_2 = arith.constant 0 : index
    %3 = vector.load %arg3[%c0, %c0_1, %c0_2] : memref<1x8x128xf32, #tpu.memory_space<vmem>>, vector<1x8x128xf32>
    %4 = vector.shape_cast %3 : vector<1x8x128xf32> to vector<8x128xf32>
    %c0_3 = arith.constant 0 : index
    %c0_4 = arith.constant 0 : index
    %c0_5 = arith.constant 0 : index
    %5 = vector.load %arg2[%c0_3, %c0_4, %c0_5] : memref<1x8x128xf32, #tpu.memory_space<vmem>>, vector<1x8x128xf32>
    %6 = vector.shape_cast %5 : vector<1x8x128xf32> to vector<8x128xf32>
    %cst = arith.constant 0.000000e+00 : f32
    %7 = vector.broadcast %cst : f32 to vector<8x128xf32>
    %8 = arith.cmpf one, %4, %7 : vector<8x128xf32>
    %9 = arith.extui %8 : vector<8x128xi1> to vector<8x128xi32>
    %10 = arith.sitofp %9 : vector<8x128xi32> to vector<8x128xf32>
    %11 = arith.subf %6, %4 : vector<8x128xf32>
    %12 = math.absf %11 : vector<8x128xf32>
    %13 = arith.mulf %12, %10 : vector<8x128xf32>
    %14 = arith.cmpf one, %13, %13 : vector<8x128xf32>
    %cst_6 = arith.constant 0.000000e+00 : f32
    %15 = vector.broadcast %cst_6 : f32 to vector<8x128xf32>
    %16 = arith.select %14, %15, %13 : vector<8x128xi1>, vector<8x128xf32>
    %17 = vector.shape_cast %16 : vector<8x128xf32> to vector<1x8x128xf32>
    %cst_7 = arith.constant dense<0.000000e+00> : vector<8x128xf32>
    %18 = vector.multi_reduction <add>, %17, %cst_7 [0] : vector<1x8x128xf32> to vector<8x128xf32>
    %19 = vector.shape_cast %10 : vector<8x128xf32> to vector<1x8x128xf32>
    %cst_8 = arith.constant dense<0.000000e+00> : vector<8x128xf32>
    %20 = vector.multi_reduction <add>, %19, %cst_8 [0] : vector<1x8x128xf32> to vector<8x128xf32>
    %c0_9 = arith.constant 0 : index
    %c0_10 = arith.constant 0 : index
    %c0_11 = arith.constant 0 : index
    %c0_12 = arith.constant 0 : index
    %21 = vector.load %arg4[%c0_9, %c0_10, %c0_11, %c0_12] : memref<1x2x8x128xf32, #tpu.memory_space<vmem>>, vector<1x1x8x128xf32>
    %22 = vector.shape_cast %21 : vector<1x1x8x128xf32> to vector<8x128xf32>
    %23 = arith.addf %22, %18 : vector<8x128xf32>
    %c0_13 = arith.constant 0 : index
    %c0_14 = arith.constant 0 : index
    %c0_15 = arith.constant 0 : index
    %c0_16 = arith.constant 0 : index
    %24 = vector.load %arg4[%c0_13, %c0_14, %c0_15, %c0_16] : memref<1x2x8x128xf32, #tpu.memory_space<vmem>>, vector<1x1x8x128xf32>
    %25 = vector.shape_cast %24 : vector<1x1x8x128xf32> to vector<8x128xf32>
    %26 = vector.shape_cast %23 : vector<8x128xf32> to vector<1x1x8x128xf32>
    tpu.vector_store %arg4[%c0_13, %c0_14, %c0_15, %c0_16], %26 {strides = array<i32>} : memref<1x2x8x128xf32, #tpu.memory_space<vmem>>, vector<1x1x8x128xf32>,
    %c0_17 = arith.constant 0 : index
    %c1 = arith.constant 1 : index
    %c0_18 = arith.constant 0 : index
    %c0_19 = arith.constant 0 : index
    %27 = vector.load %arg4[%c0_17, %c1, %c0_18, %c0_19] : memref<1x2x8x128xf32, #tpu.memory_space<vmem>>, vector<1x1x8x128xf32>
    %28 = vector.shape_cast %27 : vector<1x1x8x128xf32> to vector<8x128xf32>
    %29 = arith.addf %28, %20 : vector<8x128xf32>
    %c0_20 = arith.constant 0 : index
    %c1_21 = arith.constant 1 : index
    %c0_22 = arith.constant 0 : index
    %c0_23 = arith.constant 0 : index
    %30 = vector.load %arg4[%c0_20, %c1_21, %c0_22, %c0_23] : memref<1x2x8x128xf32, #tpu.memory_space<vmem>>, vector<1x1x8x128xf32>
    %31 = vector.shape_cast %30 : vector<1x1x8x128xf32> to vector<8x128xf32>
    %32 = vector.shape_cast %29 : vector<8x128xf32> to vector<1x1x8x128xf32>
    tpu.vector_store %arg4[%c0_20, %c1_21, %c0_22, %c0_23], %32 {strides = array<i32>} : memref<1x2x8x128xf32, #tpu.memory_space<vmem>>, vector<1x1x8x128xf32>,
    return
  }
  func.func @transform_0(%arg0: i32, %arg1: i32) -> (i32, i32, i32) {
    %c0_i32 = arith.constant 0 : i32
    %c0_i32_0 = arith.constant 0 : i32
    return %arg0, %arg1, %c0_i32 : i32, i32, i32
  }
  func.func @transform_1(%arg0: i32, %arg1: i32) -> (i32, i32, i32) {
    %c0_i32 = arith.constant 0 : i32
    %c0_i32_0 = arith.constant 0 : i32
    return %arg0, %arg1, %c0_i32 : i32, i32, i32
  }
  func.func @transform_2(%arg0: i32, %arg1: i32) -> (i32, i32, i32, i32) {
    %c0_i32 = arith.constant 0 : i32
    %c0_i32_0 = arith.constant 0 : i32
    %c0_i32_1 = arith.constant 0 : i32
    %c0_i32_2 = arith.constant 0 : i32
    return %arg0, %c0_i32, %c0_i32_0, %c0_i32_1 : i32, i32, i32, i32
  }
}

</mosaic_0001>

<llo_original>
// kernel: tpu_custom_call.1
$region0: #{tpu_custom_call.1}
  #allocation0 [shape = 'u32[]', space=smem, size = 0x4, offset = 0x4, fixed_abs, tag = 'smem constant byte address 0x4 - core index']
  #allocation1 [shape = 'u32[144,128]{1,0:T(1,128)}', space=vmem, size = 0x12000, scoped, tag = 'internal scratch']
  %s0 = inlined_call_operand.hbm [shape: f32[2,8,128], index: 0, kind: input, shape index: {}]
  %s1 = inlined_call_operand.hbm [shape: f32[2,8,128], index: 1, kind: input, shape index: {}]
  %s2 = inlined_call_operand.hbm [shape: f32[2,2,8,128], index: 2, kind: output, shape index: {}]
  %s3 = sld [smem:[#allocation0]]
  $region53: #{tpu_custom_call.1} parent=0
    _
  %s5 = ssub.s32 1, %s3
  %s6 = scalar_select 0, %s5, %s3
  $region1: #{tpu_custom_call.1} parent=0
    #allocation2 [shape = 'u8[8192]{0}', space=vmem, size = 0x2000, scoped, tag = 'input window, operand 0']
    #allocation3 [shape = 's32[2]{0}', space=sflag, size = 0x8, scoped, tag = 'scoped memory for tpu_custom_call.1']
    #allocation4 [shape = 's32[2]{0}', space=sflag, size = 0x8, scoped, tag = 'scoped memory for tpu_custom_call.1']
    #allocation5 [shape = 'u8[8192]{0}', space=vmem, size = 0x2000, scoped, tag = 'input window, operand 1']
    #allocation6 [shape = 's32[2]{0}', space=sflag, size = 0x8, scoped, tag = 'scoped memory for tpu_custom_call.1']
    #allocation7 [shape = 'u8[16384]{0}', space=vmem, size = 0x4000, scoped, tag = 'output window, operand 0']
    %7 = vsyncpa [#allocation3], 0
    %s8 = scalar_lea.sflag [#allocation3], 1
    %9 = vsyncpa %s8, 0
    %10 = vsyncpa [#allocation6], 0
    %s11 = scalar_lea.sflag [#allocation6], 1
    %12 = vsyncpa %s11, 0
    %13 = vsyncpa [#allocation4], 0
    %s14 = scalar_lea.sflag [#allocation4], 1
    %15 = vsyncpa %s14, 0
    loop: start=0, step=1, limit=4
    $region2: #{tpu_custom_call.1} parent=1 // loop_pre_header
      _
    $region3: #{tpu_custom_call.1} parent=1 // loop_header
      %s17 = sphi 0, %s21
      %p18 = scmp.ge.s32.totalorder %s17, 4
      %s24 = sphi 0, %s36
      %s25 = sphi 0, %s32
      %s26 = sphi 0, %s24
      %s27 = sphi 0, %s25
      %s28 = sphi 0, %s26
      %s29 = sphi 0, %s27
      %s41 = sphi 0, %s43
      %s44 = sphi 0, %s41
      %s45 = sphi 0, %s44
      %s61 = sphi 0, %s45
      %s69 = sphi 0, %s71
      %s72 = sphi 0, %s69
      %s73 = sphi 0, %s72
      %s89 = sphi 0, %s73
      %s95 = sphi 0, %s97
      %s98 = sphi 0, %s95
      %s99 = sphi 0, %s98
      %s115 = sphi 0, %s99
    $region4: #{tpu_custom_call.1} parent=1 // loop_header_branch
      %20 = sbr.rel (%p18) target = $region8
    $region5: #{tpu_custom_call.1} parent=1 // loop_body
      %s22 = ssub.s32 %s17, 1
      %s23 = ssub.s32 %s17, 2
      %s30 = sadd.s32 1, %s25
      %p31 = scmp.ge.s32.totalorder %s30, 1
      %s32 = scalar_select %p31, 0, %s30
      %s33 = sadd.s32 1, %s24
      %s34 = scalar_select %p31, %s33, %s24
      %p35 = scmp.ge.s32.totalorder %s34, 2
      %s36 = scalar_select %p35, 0, %s34
      %s37 = ssub.s32 %s24, %s36
      %s38 = ssub.s32 %s25, %s32
      %s39 = sor.u32 %s37, %s38
      %p40 = scmp.eq.s32.totalorder %s39, 0
      %s42 = sadd.s32 %s41, 1
      %s43 = scalar_select %p40, %s41, %s42
      %p46 = pneg %p40
      %p47 = scmp.eq.s32.totalorder %s17, 1
      %p48 = por %p46, %p47
      %p49 = scmp.ne.s32.totalorder %s41, %s44
      %p50 = scmp.eq.s32.totalorder %s17, 0
      %p51 = por %p49, %p50
      %p52 = scmp.ne.s32.totalorder %s41, %s44
      %p53 = scmp.eq.s32.totalorder %s22, 1
      %p54 = por %p52, %p53
      %p55 = scmp.ne.s32.totalorder %s44, %s45
      %p56 = scmp.eq.s32.totalorder %s22, 0
      %p57 = por %p55, %p56
      %p58 = scmp.ne.s32.totalorder %s44, %s45
      %p59 = scmp.eq.s32.totalorder %s23, 1
      %p60 = por %p58, %p59
      %p62 = scmp.ne.s32.totalorder %s45, %s61
      %p63 = scmp.eq.s32.totalorder %s23, 0
      %p64 = por %p62, %p63
      %s65 = ssub.s32 %s24, %s36
      %s66 = ssub.s32 %s25, %s32
      %s67 = sor.u32 %s65, %s66
      %p68 = scmp.eq.s32.totalorder %s67, 0
      %s70 = sadd.s32 %s69, 1
      %s71 = scalar_select %p68, %s69, %s70
      %p74 = pneg %p68
      %p75 = scmp.eq.s32.totalorder %s17, 1
      %p76 = por %p74, %p75
      %p77 = scmp.ne.s32.totalorder %s69, %s72
      %p78 = scmp.eq.s32.totalorder %s17, 0
      %p79 = por %p77, %p78
      %p80 = scmp.ne.s32.totalorder %s69, %s72
      %p81 = scmp.eq.s32.totalorder %s22, 1
      %p82 = por %p80, %p81
      %p83 = scmp.ne.s32.totalorder %s72, %s73
      %p84 = scmp.eq.s32.totalorder %s22, 0
      %p85 = por %p83, %p84
      %p86 = scmp.ne.s32.totalorder %s72, %s73
      %p87 = scmp.eq.s32.totalorder %s23, 1
      %p88 = por %p86, %p87
      %p90 = scmp.ne.s32.totalorder %s73, %s89
      %p91 = scmp.eq.s32.totalorder %s23, 0
      %p92 = por %p90, %p91
      %s93 = ssub.s32 %s24, %s36
      %p94 = scmp.eq.s32.totalorder %s93, 0
      %s96 = sadd.s32 %s95, 1
      %s97 = scalar_select %p94, %s95, %s96
      %p100 = pneg %p94
      %p101 = scmp.eq.s32.totalorder %s17, 1
      %p102 = por %p100, %p101
      %p103 = scmp.ne.s32.totalorder %s95, %s98
      %p104 = scmp.eq.s32.totalorder %s17, 0
      %p105 = por %p103, %p104
      %p106 = scmp.ne.s32.totalorder %s95, %s98
      %p107 = scmp.eq.s32.totalorder %s22, 1
      %p108 = por %p106, %p107
      %p109 = scmp.ne.s32.totalorder %s98, %s99
      %p110 = scmp.eq.s32.totalorder %s22, 0
      %p111 = por %p109, %p110
      %p112 = scmp.ne.s32.totalorder %s98, %s99
      %p113 = scmp.eq.s32.totalorder %s23, 1
      %p114 = por %p112, %p113
      %p116 = scmp.ne.s32.totalorder %s99, %s115
      %p117 = scmp.eq.s32.totalorder %s23, 0
      %p118 = por %p116, %p117
      %p119 = scmp.le.s32.totalorder 1, %s17
      %p120 = scmp.lt.s32.totalorder %s17, 3
      %p121 = pnand %p119, %p120
      %p122 = pneg %p121
      // Predicated region
      $region9: #{tpu_custom_call.1} parent=5 // pred_check
        _
      $region10: #{tpu_custom_call.1} parent=5 // pred_check_branch
        %124 = sbr.rel (%p121) target = $region12
      $region11: #{tpu_custom_call.1} parent=5 // pred_region
        %s125 = ssub.s32 %s17, 1
      $region12: #{tpu_custom_call.1} parent=5 // pred_fallthru
        _
      %p126 = scmp.lt.s32.totalorder %s17, 2
      // Predicated region
      $region13: #{tpu_custom_call.1} parent=5 // pred_check
        %p127 = pneg %p126
      $region14: #{tpu_custom_call.1} parent=5 // pred_check_branch
        %129 = sbr.rel (%p127) target = $region16
      $region15: #{tpu_custom_call.1} parent=5 // pred_region
        // Predicated region
        $region17: #{tpu_custom_call.1} parent=15 // pred_check
          %p130 = pneg %p51
        $region18: #{tpu_custom_call.1} parent=15 // pred_check_branch
          %132 = sbr.rel (%p130) target = $region20
        $region19: #{tpu_custom_call.1} parent=15 // pred_region
          %s133 = sand.u32 %s41, 1
          %s134 = scalar_lea.sflag [#allocation3], %s133
          %s135 = sand.u32 %s41, 1
          %s136 = smul.addr %s135, 8
          %s137 = scalar_lea.vmem [#allocation2], %s136
          %s139 = ssub.s32 128, 128
          %140 = vsyncadd %s134, %s139
          %s141 = sadd.s32 %s25, %s24
          %s142 = smul.addr %s141, 128
          %s143 = scalar_lea.hbm %s0, %s142
          %s145 = sshll.u32 %s137, 4
          %s146 = int_to_ptr.vmem [resolvable:$true] %s145
          %148 = dma.hbm_to_vmem [thread:$0]  %s143, 128, %s146, %s134
        $region20: #{tpu_custom_call.1} parent=15 // pred_fallthru
          _
        // Predicated region
        $region21: #{tpu_custom_call.1} parent=15 // pred_check
          %p149 = pneg %p79
        $region22: #{tpu_custom_call.1} parent=15 // pred_check_branch
          %151 = sbr.rel (%p149) target = $region24
        $region23: #{tpu_custom_call.1} parent=15 // pred_region
          %s152 = sand.u32 %s69, 1
          %s153 = scalar_lea.sflag [#allocation6], %s152
          %s154 = sand.u32 %s69, 1
          %s155 = smul.addr %s154, 8
          %s156 = scalar_lea.vmem [#allocation5], %s155
          %s158 = ssub.s32 128, 128
          %159 = vsyncadd %s153, %s158
          %s160 = sadd.s32 %s25, %s24
          %s161 = smul.addr %s160, 128
          %s162 = scalar_lea.hbm %s1, %s161
          %s164 = sshll.u32 %s156, 4
          %s165 = int_to_ptr.vmem [resolvable:$true] %s164
          %167 = dma.hbm_to_vmem [thread:$0]  %s162, 128, %s165, %s153
        $region24: #{tpu_custom_call.1} parent=15 // pred_fallthru
          _
      $region16: #{tpu_custom_call.1} parent=5 // pred_fallthru
        _
      %p168 = scmp.le.s32.totalorder 1, %s17
      %p169 = scmp.lt.s32.totalorder %s17, 3
      %p170 = pnand %p168, %p169
      %p171 = pneg %p170
      // Predicated region
      $region25: #{tpu_custom_call.1} parent=5 // pred_check
        _
      $region26: #{tpu_custom_call.1} parent=5 // pred_check_branch
        %173 = sbr.rel (%p170) target = $region28
      $region27: #{tpu_custom_call.1} parent=5 // pred_region
        %s174 = ssub.s32 %s17, 1
        %s175 = sand.u32 %s44, 1
        %s176 = scalar_lea.sflag [#allocation3], %s175
        %s177 = sand.u32 %s44, 1
        %s178 = smul.addr %s177, 8
        %s179 = scalar_lea.vmem [#allocation2], %s178
        // Predicated region
        $region29: #{tpu_custom_call.1} parent=27 // pred_check
          %p180 = pneg %p57
        $region30: #{tpu_custom_call.1} parent=27 // pred_check_branch
          %182 = sbr.rel (%p180) target = $region32
        $region31: #{tpu_custom_call.1} parent=27 // pred_region
          %183 = dma.done %s176, 128
        $region32: #{tpu_custom_call.1} parent=27 // pred_fallthru
          _
        %s184 = sand.u32 %s72, 1
        %s185 = scalar_lea.sflag [#allocation6], %s184
        %s186 = sand.u32 %s72, 1
        %s187 = smul.addr %s186, 8
        %s188 = scalar_lea.vmem [#allocation5], %s187
        // Predicated region
        $region33: #{tpu_custom_call.1} parent=27 // pred_check
          %p189 = pneg %p85
        $region34: #{tpu_custom_call.1} parent=27 // pred_check_branch
          %191 = sbr.rel (%p189) target = $region36
        $region35: #{tpu_custom_call.1} parent=27 // pred_region
          %192 = dma.done %s185, 128
        $region36: #{tpu_custom_call.1} parent=27 // pred_fallthru
          _
        %s193 = sand.u32 %s44, 1
        %s194 = scalar_lea.sflag [#allocation3], %s193
        %s195 = sand.u32 %s44, 1
        %s196 = smul.addr %s195, 8
        %s197 = scalar_lea.vmem [#allocation2], %s196
        %p198 = pneg %p57
        %p199 = pneg %p54
        %s200 = sand.u32 %s72, 1
        %s201 = scalar_lea.sflag [#allocation6], %s200
        %s202 = sand.u32 %s72, 1
        %s203 = smul.addr %s202, 8
        %s204 = scalar_lea.vmem [#allocation5], %s203
        %p205 = pneg %p85
        %p206 = pneg %p82
        %p207 = pneg %p111
        %p208 = pneg %p108
        %s209 = sand.u32 %s98, 1
        %s210 = scalar_lea.sflag [#allocation4], %s209
        %s211 = sand.u32 %s98, 1
        %s212 = smul.addr %s211, 16
        %s213 = scalar_lea.vmem [#allocation7], %s212
        %p214 = scmp.eq.s32.totalorder %s27, 0
        // Predicated region
        $region37: #{tpu_custom_call.1} parent=27 // pred_check
          %p215 = pneg %p214
        $region38: #{tpu_custom_call.1} parent=27 // pred_check_branch
          %217 = sbr.rel (%p215) target = $region40
        $region39: #{tpu_custom_call.1} parent=27 // pred_region
          %218 = vst [vmem:[%s213] sm:$0xff] 0.0
          %219 = vst [vmem:[%s213 + $0x8] sm:$0xff] 0.0
        $region40: #{tpu_custom_call.1} parent=27 // pred_fallthru
          _
        %v220 = vld [vmem:[%s188] sm:$0xff]
        %v221 = vld [vmem:[%s179] sm:$0xff]
        %vm222 = vcmp.ne.f32.partialorder %v220, 0.0
        %v223 = vsel %vm222, 1, 0
        %v224 = vcvt.s32.f32 %v223
        %v225 = vsub.f32 %v221, %v220
        %v226 = vand.u32 2147483647, %v225
        %v227 = vmul.f32 %v226, %v224
        %vm228 = vcmp.ne.f32.partialorder %v227, %v227
        %v229 = vsel %vm228, 0.0, %v227
        %v230 = vadd.f32 %v229, 0.0
        %v231 = vadd.f32 %v224, 0.0
        %v232 = vld [vmem:[%s213] sm:$0xff]
        %v233 = vadd.f32 %v232, %v230
        %234 = vst [vmem:[%s213] sm:$0xff] %v233
        %s235 = scalar_lea.vmem %s213, 8 [#allocation7]
        %v236 = vld [vmem:[%s235] sm:$0xff]
        %v237 = vadd.f32 %v236, %v231
        %238 = vst [vmem:[%s235] sm:$0xff] %v237
        %s239 = sand.u32 %s98, 1
        %s240 = scalar_lea.sflag [#allocation4], %s239
        %s241 = sand.u32 %s98, 1
        %s242 = smul.addr %s241, 16
        %s243 = scalar_lea.vmem [#allocation7], %s242
        // Predicated region
        $region41: #{tpu_custom_call.1} parent=27 // pred_check
          %p244 = pneg %p108
        $region42: #{tpu_custom_call.1} parent=27 // pred_check_branch
          %246 = sbr.rel (%p244) target = $region44
        $region43: #{tpu_custom_call.1} parent=27 // pred_region
          %s248 = ssub.s32 256, 256
          %249 = vsyncadd %s240, %s248
          %s250 = smul.addr %s26, 2
          %s251 = smul.addr %s250, 128
          %s252 = scalar_lea.hbm %s2, %s251
          %s253 = sshll.u32 %s243, 4
          %s254 = int_to_ptr.vmem [resolvable:$true] %s253
          %259 = dma.vmem_to_hbm [thread:$0]  %s254, 256, %s252, %s240, 128, 128, 8
        $region44: #{tpu_custom_call.1} parent=27 // pred_fallthru
          _
      $region28: #{tpu_custom_call.1} parent=5 // pred_fallthru
        _
      %p260 = scmp.le.s32.totalorder 2, %s17
      // Predicated region
      $region45: #{tpu_custom_call.1} parent=5 // pred_check
        %p261 = pneg %p260
      $region46: #{tpu_custom_call.1} parent=5 // pred_check_branch
        %263 = sbr.rel (%p261) target = $region48
      $region47: #{tpu_custom_call.1} parent=5 // pred_region
        %s264 = ssub.s32 %s17, 2
        // Predicated region
        $region49: #{tpu_custom_call.1} parent=47 // pred_check
          %p265 = pneg %p114
        $region50: #{tpu_custom_call.1} parent=47 // pred_check_branch
          %267 = sbr.rel (%p265) target = $region52
        $region51: #{tpu_custom_call.1} parent=47 // pred_region
          %s268 = sand.u32 %s99, 1
          %s269 = scalar_lea.sflag [#allocation4], %s268
          %s270 = sand.u32 %s99, 1
          %s271 = smul.addr %s270, 16
          %s272 = scalar_lea.vmem [#allocation7], %s271
          %273 = dma.done %s269, 256
        $region52: #{tpu_custom_call.1} parent=47 // pred_fallthru
          _
      $region48: #{tpu_custom_call.1} parent=5 // pred_fallthru
        _
    $region6: #{tpu_custom_call.1} parent=1 // loop_footer
      %s21 = sadd.s32 1, %s17
    $region7: #{tpu_custom_call.1} parent=1 // loop_footer_branch
      %16 = sbr.rel target = $region3
    $region8: #{tpu_custom_call.1} parent=1 // loop_exit
      _
    %274 = vsyncpa [#allocation3], 1
    %s275 = scalar_lea.sflag [#allocation3], 1
    %276 = vsyncpa %s275, 1
    %277 = vsyncpa [#allocation6], 1
    %s278 = scalar_lea.sflag [#allocation6], 1
    %279 = vsyncpa %s278, 1
    %280 = vsyncpa [#allocation4], 1
    %s281 = scalar_lea.sflag [#allocation4], 1
    %282 = vsyncpa %s281, 1

</llo_original>
